<compile_context>
chip_gen: v6e
topology: v6e:2x2x1
jax: 0.10.0
libtpu: 0.0.40
codegen_flags: <defaults>
</compile_context>

<pallas_src>
import functools

import numpy as np
import jax
import jax.numpy as jnp
from jax.experimental import pallas as pl
from jax.experimental.pallas import tpu as pltpu


def _round_up(x, m):
    return ((x + m - 1) // m) * m


def _cox_rowsum_kernel(expd_ref, mask_ref, out_ref, *, s_total, s_tile):
    """Per S-tile: sum over valid rows of log(sum_j counts[s,j]*exp(pred_j - m_g))."""
    s = pl.program_id(0)

    expd = expd_ref[...]                                   # (1, Np)       f32
    counts = mask_ref[...]                                 # (s_tile, Np)  int8

    # Single f32 temp: convert * broadcast-multiply, then lane-axis reduce.
    weighted = counts.astype(jnp.float32) * expd           # (s_tile, Np)
    sums = jnp.sum(weighted, axis=1, keepdims=True)        # (s_tile, 1)

    # Padded (all-zero) rows would give log(0) = -inf; guard with row validity.
    row_id = jax.lax.broadcasted_iota(jnp.int32, (s_tile, 1), 0) + s * s_tile
    row_valid = row_id < s_total                            # (s_tile, 1)
    safe = jnp.where(row_valid, sums, jnp.float32(1.0))
    logs = jnp.where(row_valid, jnp.log(safe), jnp.float32(0.0))

    partial = jnp.sum(logs, axis=0, keepdims=True)          # (1, 1)
    out_ref[...] = jnp.broadcast_to(partial, (1, 128))      # lane-dense store


def make_cox_loss(Rlist, s_tile=None):
    """Build once per Rlist (mask encode + H2D hoisted out of the hot path).

    Returns a function pred -> loss (shape (1,)) matching the torch module.
    """
    S = len(Rlist)
    N = 1 + max(max(sub) for sub in Rlist)
    # Callers may pass longer preds; we only need indices that appear in Rlist,
    # but pad N to whatever the caller's pred length is at call time instead.
    # Here we take N from the largest index; the closure re-checks at call.

    # ---- VMEM/generation-aware tile selection -------------------------------
    try:
        vmem_cap = int(pltpu.get_tpu_info().vmem_capacity_bytes)
    except Exception:  # CPU tracing / emulator fallback
        vmem_cap = 128 << 20

    def build(N_actual):
        Np = _round_up(max(N_actual, 1), 128)               # lane-pad samples

        if s_tile is not None:
            t = _round_up(int(s_tile), 32)
        else:
            # Per-row VMEM cost ~ 2*Np int8 (double-buffered mask) + 4*Np f32 temp.
            budget = min(vmem_cap // 3, 48 << 20)
            t = budget // (6 * Np + 512)
            t = max(32, (t // 32) * 32)
            t = min(t, 4096)
        s_cap = _round_up(max(S, 1), 32)
        if s_cap >= 64:
            # Keep grid_s >= 2 so both v7x TensorCores get work.
            t = min(t, _round_up((s_cap + 1) // 2, 32))
        else:
            t = min(t, s_cap)

        S_pad = _round_up(S, t)
        grid_s = S_pad // t

        # ---- host-side encoding (done once) ---------------------------------
        rows = np.concatenate(
            [np.full(len(sub), i, dtype=np.int64) for i, sub in enumerate(Rlist)])
        cols = np.concatenate([np.asarray(sub, dtype=np.int64) for sub in Rlist])
        mask_np = np.zeros((S_pad, Np), dtype=np.int8)
        # add.at keeps duplicate indices (matches torch's pred[subset] gather);
        # int8 assumes < 128 repeats of one index within a subset.
        np.add.at(mask_np, (rows, cols), 1)

        ev_idx = np.asarray([sub[0] for sub in Rlist], dtype=np.int64)
        counts_np = np.zeros((N_actual,), dtype=np.float32)
        np.add.at(counts_np, ev_idx, 1.0)

        mask_dev = jnp.asarray(mask_np)                      # (S_pad, Np) int8
        counts_dev = jnp.asarray(counts_np)                  # (N,)        f32

        # ---- explicit VMEM limit (tile + temps + headroom) ------------------
        per_tile = t * Np * (2 + 4)                          # 2x int8 buf + f32 temp
        misc = 2 * 4 * Np + 4 * 128 * grid_s + (2 << 20)
        vmem_limit = int(min(max(per_tile + misc, 16 << 20), int(vmem_cap * 0.9)))

        kernel = functools.partial(_cox_rowsum_kernel, s_total=S, s_tile=t)

        call = pl.pallas_call(
            kernel,
            out_shape=jax.ShapeDtypeStruct((grid_s, 128), jnp.float32),
            grid_spec=pl.GridSpec(
                grid=(grid_s,),
                in_specs=[
                    pl.BlockSpec((1, Np), lambda s: (0, 0)),     # exp(pred-m): resident
                    pl.BlockSpec((t, Np), lambda s: (s, 0)),     # int8 counts: streamed
                ],
                out_specs=pl.BlockSpec((1, 128), lambda s: (s, 0)),
            ),
            compiler_params=pltpu.CompilerParams(
                dimension_semantics=("parallel",),               # v7x 2xTC shardable
                vmem_limit_bytes=vmem_limit,
            ),
        )

        @jax.jit
        def loss_fn(pred, mask, counts):
            pred = pred.astype(jnp.float32)
            m_g = jnp.max(pred)
            expd = jnp.exp(pred - m_g)                           # one O(N) exp pass
            expd_pad = jnp.zeros((1, Np), jnp.float32).at[0, :pred.shape[0]].set(expd)
            partials = call(expd_pad, mask)                      # (grid_s, 128)
            total_lse = jnp.sum(partials[:, 0]) + jnp.float32(S) * m_g
            ev_total = jnp.sum(pred * counts)                    # sum_s pred[subset_s[0]]
            return (total_lse - ev_total).reshape(1)             # == -z

        return lambda pred: loss_fn(pred, mask_dev, counts_dev)

    cache = {}

    def run(pred):
        pred = jnp.asarray(pred, jnp.float32)
        n = int(pred.shape[0])
        if n not in cache:
            cache[n] = build(n)
        return cache[n](pred)

    return run


def cox_loss_pallas(pred, Rlist, s_tile=None):
    """Convenience one-shot wrapper (rebuilds the mask each call)."""
    return make_cox_loss(Rlist, s_tile=s_tile)(pred)


def cox_loss_ref(pred, Rlist):
    """Direct float64 numpy port of the torch module."""
    p = np.asarray(pred, np.float64)
    z = 0.0
    for sub in Rlist:
        z += p[sub[0]] - np.log(np.sum(np.exp(p[np.asarray(sub)])))
    return np.array([-z], dtype=np.float32)


if __name__ == "__main__":
    key = jax.random.PRNGKey(0)
    k1, k2 = jax.random.split(key)

    # ---- test 1: tiny problem (includes a duplicated index in a subset) ----
    N = 8
    Rlist = [list(range(0, N)), [2, 2, 5, 7], list(range(5, N))]
    pred = jax.random.normal(k1, (N,), dtype=jnp.float32)

    out = jax.block_until_ready(cox_loss_pallas(pred, Rlist))
    np.testing.assert_allclose(np.asarray(out), cox_loss_ref(pred, Rlist),
                               rtol=5e-4, atol=1e-4)

    # ---- test 2: larger ragged risk sets, forced multi-tile grid ----
    rng = np.random.default_rng(0)
    N2, S2 = 300, 100
    Rlist2 = []
    for _ in range(S2):
        size = int(rng.integers(1, N2 + 1))
        Rlist2.append([int(j) for j in rng.choice(N2, size=size, replace=False)])
    pred2 = jax.random.normal(k2, (N2,), dtype=jnp.float32)

    out2 = jax.block_until_ready(cox_loss_pallas(pred2, Rlist2, s_tile=32))
    np.testing.assert_allclose(np.asarray(out2), cox_loss_ref(pred2, Rlist2),
                               rtol=5e-4, atol=1e-4)

    # ---- test 3: same problem via the cached factory, auto tile (grid>=2) ----
    loss_fn = make_cox_loss(Rlist2)
    out3 = jax.block_until_ready(loss_fn(pred2))
    np.testing.assert_allclose(np.asarray(out3), cox_loss_ref(pred2, Rlist2),
                               rtol=5e-4, atol=1e-4)

    print("KERNEL_OK")
</pallas_src>

<mosaic_0001>
module attributes {stable_mosaic.version = 11 : i64} {
  func.func @_cox_rowsum_kernel(%arg0: i32, %arg1: memref<1x128xf32, #tpu.memory_space<vmem>>, %arg2: memref<32x128xi8, #tpu.memory_space<vmem>>, %arg3: memref<1x128xf32, #tpu.memory_space<vmem>>) attributes {dimension_semantics = [#tpu.dimension_semantics<parallel>], iteration_bounds = array<i64: 1>, scalar_prefetch = 0 : i64, scratch_operands = 0 : i64, tpu.core_type = #tpu.core_type<tc>, window_params = [{pipeline_mode = #tpu.pipeline_mode<synchronous>, transform_indices = @transform_0, window_bounds = array<i64: 1, 128>}, {transform_indices = @transform_1, window_bounds = array<i64: 32, 128>}, {transform_indices = @transform_2, window_bounds = array<i64: 1, 128>}]} {
    %c0 = arith.constant 0 : index
    %c0_0 = arith.constant 0 : index
    %0 = vector.load %arg1[%c0, %c0_0] : memref<1x128xf32, #tpu.memory_space<vmem>>, vector<1x128xf32>
    %c0_1 = arith.constant 0 : index
    %c0_2 = arith.constant 0 : index
    %1 = vector.load %arg2[%c0_1, %c0_2] : memref<32x128xi8, #tpu.memory_space<vmem>>, vector<32x128xi8>
    %2 = arith.sitofp %1 : vector<32x128xi8> to vector<32x128xf32>
    %3 = vector.broadcast %0 : vector<1x128xf32> to vector<32x128xf32>
    %4 = arith.mulf %2, %3 : vector<32x128xf32>
    %cst = arith.constant dense<0.000000e+00> : vector<32xf32>
    %5 = vector.multi_reduction <add>, %4, %cst [1] : vector<32x128xf32> to vector<32xf32>
    %6 = vector.shape_cast %5 : vector<32xf32> to vector<32x1xf32>
    %7 = tpu.iota {dimensions = array<i32: 0>} : vector<32x1xi32>
    %c32_i32 = arith.constant 32 : i32
    %8 = arith.muli %arg0, %c32_i32 : i32
    %9 = vector.broadcast %8 : i32 to vector<32x1xi32>
    %10 = arith.addi %7, %9 : vector<32x1xi32>
    %c3_i32 = arith.constant 3 : i32
    %11 = vector.broadcast %c3_i32 : i32 to vector<32x1xi32>
    %12 = arith.cmpi slt, %10, %11 : vector<32x1xi32>
    %cst_3 = arith.constant 1.000000e+00 : f32
    %13 = vector.broadcast %cst_3 : f32 to vector<32x1xf32>
    %14 = arith.select %12, %6, %13 : vector<32x1xi1>, vector<32x1xf32>
    %15 = math.log %14 : vector<32x1xf32>
    %cst_4 = arith.constant 0.000000e+00 : f32
    %16 = vector.broadcast %cst_4 : f32 to vector<32x1xf32>
    %17 = arith.select %12, %15, %16 : vector<32x1xi1>, vector<32x1xf32>
    %cst_5 = arith.constant dense<0.000000e+00> : vector<1xf32>
    %18 = vector.multi_reduction <add>, %17, %cst_5 [0] : vector<32x1xf32> to vector<1xf32>
    %19 = vector.shape_cast %18 : vector<1xf32> to vector<1x1xf32>
    %20 = vector.shape_cast %19 : vector<1x1xf32> to vector<1x1xf32>
    %21 = vector.broadcast %20 : vector<1x1xf32> to vector<1x128xf32>
    %c0_6 = arith.constant 0 : index
    %c0_7 = arith.constant 0 : index
    %22 = vector.load %arg3[%c0_6, %c0_7] : memref<1x128xf32, #tpu.memory_space<vmem>>, vector<1x128xf32>
    tpu.vector_store %arg3[%c0_6, %c0_7], %21 {strides = array<i32>} : memref<1x128xf32, #tpu.memory_space<vmem>>, vector<1x128xf32>,
    return
  }
  func.func @transform_0(%arg0: i32) -> (i32, i32) {
    %c0_i32 = arith.constant 0 : i32
    %c0_i32_0 = arith.constant 0 : i32
    %c0_i32_1 = arith.constant 0 : i32
    return %c0_i32, %c0_i32_0 : i32, i32
  }
  func.func @transform_1(%arg0: i32) -> (i32, i32) {
    %c0_i32 = arith.constant 0 : i32
    %c0_i32_0 = arith.constant 0 : i32
    return %arg0, %c0_i32 : i32, i32
  }
  func.func @transform_2(%arg0: i32) -> (i32, i32) {
    %c0_i32 = arith.constant 0 : i32
    %c0_i32_0 = arith.constant 0 : i32
    return %arg0, %c0_i32 : i32, i32
  }
}

</mosaic_0001>

<llo_original>
// kernel: loss_fn.1
$region0: #{loss_fn.1}
  #allocation0 [shape = 'u32[]', space=smem, size = 0x4, offset = 0x4, fixed_abs, tag = 'smem constant byte address 0x4 - core index']
  #allocation1 [shape = 'u32[144,128]{1,0:T(1,128)}', space=vmem, size = 0x12000, scoped, tag = 'internal scratch']
  %s0 = inlined_call_operand.vmem [shape: f32[1,128], index: 0, kind: input, shape index: {}]
  %s1 = inlined_call_operand.vmem [shape: s8[32,128], index: 1, kind: input, shape index: {}]
  %s2 = inlined_call_operand.vmem [shape: f32[1,128], index: 2, kind: output, shape index: {}]
  %s3 = sld [smem:[#allocation0]]
  $region18: #{loss_fn.1} parent=0
    _
  %s5 = ssub.s32 1, %s3
  %s6 = scalar_select 0, %s5, %s3
  // Predicated region
  $region2: #{loss_fn.1} parent=0 // pred_check
    _
  $region3: #{loss_fn.1} parent=0 // pred_check_branch
    %8 = sbr.rel (0) target = $region5
  $region4: #{loss_fn.1} parent=0 // pred_region
    _
  $region5: #{loss_fn.1} parent=0 // pred_fallthru
    _
  // Predicated region
  $region6: #{loss_fn.1} parent=0 // pred_check
    _
  $region7: #{loss_fn.1} parent=0 // pred_check_branch
    %10 = sbr.rel (0) target = $region9
  $region8: #{loss_fn.1} parent=0 // pred_region
    _
  $region9: #{loss_fn.1} parent=0 // pred_fallthru
    _
  %v11 = vld [vmem:[%s0] sm:$0x1]
  %v12 = vld [vmem:[%s1] sm:$0xff]
  %v13 = vunpack.c.0.s8 %v12
  %v14 = vunpack.c.1.s8 %v12
  %v15 = vunpack.c.2.s8 %v12
  %v16 = vunpack.c.3.s8 %v12
  %v17 = vcvt.s32.f32 %v13
  %v18 = vcvt.s32.f32 %v14
  %v19 = vcvt.s32.f32 %v15
  %v20 = vcvt.s32.f32 %v16
  %v22 = vlaneseq
  %v23 = vshrl.u32 %v22, 7
  %v24 = vsub.s32 0, %v23
  %v25 = vrot.slane %v11, %v24
  %v27 = vmul.f32 %v17, %v25
  %v28 = vmul.f32 %v18, %v25
  %v29 = vmul.f32 %v19, %v25
  %v30 = vmul.f32 %v20, %v25
  %31 = vadd.xlane.f32.xlu0 %v27
  %v32 = vpop.xlane.xlu0 %31
  %33 = vadd.xlane.f32.xlu0 %v28
  %v34 = vpop.xlane.xlu0 %33
  %35 = vadd.xlane.f32.xlu0 %v29
  %v36 = vpop.xlane.xlu0 %35
  %37 = vadd.xlane.f32.xlu0 %v30
  %v38 = vpop.xlane.xlu0 %37
  %v39 = vlaneseq
  %v40 = vshrl.u32 %v39, 7
  %v41 = vadd.s32 %v40, 8
  %v42 = vadd.s32 %v40, 16
  %v43 = vadd.s32 %v40, 24
  %s44 = smul.u32 0, 32
  %v45 = vstv %s44
  %v46 = vadd.s32 %v40, %v45
  %v47 = vadd.s32 %v41, %v45
  %v48 = vadd.s32 %v42, %v45
  %v49 = vadd.s32 %v43, %v45
  %vm50 = vcmp.lt.s32.totalorder %v46, 3
  %vm51 = vcmp.lt.s32.totalorder %v47, 3
  %vm52 = vcmp.lt.s32.totalorder %v48, 3
  %vm53 = vcmp.lt.s32.totalorder %v49, 3
  %v54 = vsel %vm50, %v32, 1.0
  %v55 = vsel %vm51, %v34, 1.0
  %v56 = vsel %vm52, %v36, 1.0
  %v57 = vsel %vm53, %v38, 1.0
  %v58 = vlog2.pop %v54
  %v59 = vmul.f32 %v58, 0.6931472
  %v60 = vlog2.pop %v55
  %v61 = vmul.f32 %v60, 0.6931472
  %v62 = vlog2.pop %v56
  %v63 = vmul.f32 %v62, 0.6931472
  %v64 = vlog2.pop %v57
  %v65 = vmul.f32 %v64, 0.6931472
  %v66 = vsel %vm50, %v59, 0.0
  %v67 = vsel %vm51, %v61, 0.0
  %v68 = vsel %vm52, %v63, 0.0
  %v69 = vsel %vm53, %v65, 0.0
  %v70 = vadd.f32 %v66, %v67
  %v71 = vadd.f32 %v70, %v68
  %v72 = vadd.f32 %v71, %v69
  %v73 = vrot.slane %v72, 4
  %v74 = vadd.f32 %v72, %v73
  %v75 = vrot.slane %v74, 2
  %v76 = vadd.f32 %v74, %v75
  %v77 = vrot.slane %v76, 1
  %v78 = vadd.f32 %v76, %v77
  %79 = vst [vmem:[%s2] sm:$0x1] %v78
  // Predicated region
  $region10: #{loss_fn.1} parent=0 // pred_check
    _
  $region11: #{loss_fn.1} parent=0 // pred_check_branch
    %81 = sbr.rel (0) target = $region13
  $region12: #{loss_fn.1} parent=0 // pred_region
    _
  $region13: #{loss_fn.1} parent=0 // pred_fallthru
    _
  // Predicated region
  $region14: #{loss_fn.1} parent=0 // pred_check
    _
  $region15: #{loss_fn.1} parent=0 // pred_check_branch
    %83 = sbr.rel (0) target = $region17
  $region16: #{loss_fn.1} parent=0 // pred_region
    _
  $region17: #{loss_fn.1} parent=0 // pred_fallthru
    _

</llo_original>
